<compile_context>
chip_gen: v5e
topology: v5e:2x2
jax: 0.10.0
libtpu: 0.0.40
codegen_flags: <defaults>
</compile_context>

<pallas_src>
import jax
import jax.numpy as jnp
from jax.experimental import pallas as pl
from jax.experimental.pallas import tpu as pltpu

LANE = 128  # classifier output padded to one full lane-width


def _scls_resident_kernel(x_ref, w1_ref, b1_ref, w2_ref, b2_ref, o_ref):
    """Whole hidden dim in one step: no accumulator scratch, fused single pass.

    x_ref  : (tb, H)    f32   batch tile (cast to bf16 in-kernel)
    w1_ref : (H, H)     bf16  first Linear weight (pre-transposed, resident)
    b1_ref : (1, H)     f32
    w2_ref : (H, LANE)  bf16  second Linear weight, zero-padded 2 -> 128 cols
    b2_ref : (1, LANE)  f32   zero-padded bias
    o_ref  : (tb, LANE) f32   lane-dense output block (cols [0:2] are the logits)
    """
    x = x_ref[...].astype(jnp.bfloat16)
    h = jnp.dot(x, w1_ref[...], preferred_element_type=jnp.float32)
    h = jnp.maximum(h + b1_ref[...], 0.0)
    out = jnp.dot(h.astype(w2_ref.dtype), w2_ref[...],
                  preferred_element_type=jnp.float32) + b2_ref[...]
    o_ref[...] = out.astype(o_ref.dtype)


def _scls_ntiled_kernel(x_ref, w1_ref, b1_ref, w2_ref, b2_ref, o_ref, acc_ref):
    """Hidden (N) dim tiled.  ReLU is elementwise over H, so accumulating the
    second matmul over N-slices is exact; the accumulator is only (tb, 128) f32.

    x_ref  : (tb, H)    f32
    w1_ref : (H, tn)    bf16  N-slice of the first Linear weight
    b1_ref : (1, tn)    f32   matching bias slice
    w2_ref : (tn, LANE) bf16  matching rows of the padded classifier weight
    b2_ref : (1, LANE)  f32
    o_ref  : (tb, LANE) f32
    acc_ref: (tb, LANE) f32   output accumulator (b2 folded into the init)
    """
    n = pl.program_id(1)

    @pl.when(n == 0)
    def _():
        acc_ref[...] = jnp.broadcast_to(b2_ref[...], acc_ref.shape)

    x = x_ref[...].astype(jnp.bfloat16)
    h = jnp.dot(x, w1_ref[...], preferred_element_type=jnp.float32)
    h = jnp.maximum(h + b1_ref[...], 0.0)
    acc_ref[...] += jnp.dot(h.astype(w2_ref.dtype), w2_ref[...],
                            preferred_element_type=jnp.float32)

    @pl.when(n == pl.num_programs(1) - 1)
    def _():
        o_ref[...] = acc_ref[...].astype(o_ref.dtype)


def scls_head(x, w1, b1, w2, b2, *, tb=None, tn=None):
    """SClsHead forward: relu(x @ w1 + b1) @ w2 + b2.

    x  : [B, H]  (float32; cast to bf16 inside the kernel)
    w1 : [H, H]  first Linear weight, already transposed to [in, out]
    b1 : [H]
    w2 : [H, 2]  second Linear weight, already transposed to [in, out]
    b2 : [2]
    Returns [B, 2] float32.
    """
    B, H = x.shape
    n_cls = w2.shape[1]
    assert w1.shape == (H, H) and b1.shape == (H,)
    assert w2.shape[0] == H and b2.shape == (n_cls,)
    assert n_cls <= LANE

    # ---- generation-aware VMEM budget ---------------------------------------
    try:
        info = pltpu.get_tpu_info()
        vmem_cap = int(getattr(info, "vmem_capacity_bytes", 64 << 20))
    except Exception:
        vmem_cap = 64 << 20                     # conservative (v7x-like) fallback
    small_vmem = vmem_cap <= (64 << 20)         # v7x: 64 MiB per TensorCore
    budget = int(vmem_cap * 0.72)               # headroom for Mosaic internal scratch

    # ---- batch tiling (main tuning knob) ------------------------------------
    if tb is None:
        tb = 512 if small_vmem else 1024        # bigger tiles on 128 MiB chips
    b_pad16 = -(-B // 16) * 16                  # bf16 packs 16 rows per vreg
    tb_eff = max(16, min(tb, b_pad16))
    tb_eff = (tb_eff // 16) * 16

    def _footprint(tb_, tn_):
        buf = 2 * tb_ * H * 4                   # x tiles (f32 in VMEM, cast in-kernel)
        buf += 2 * H * tn_ * 2                  # w1 slices (bf16, double-buffered)
        buf += 2 * tn_ * 4                      # b1 slices
        buf += 2 * tn_ * LANE * 2               # w2 slices (padded, bf16)
        buf += 2 * LANE * 4                     # b2
        buf += 2 * tb_ * LANE * 4               # output tiles (f32)
        if tn_ < H:
            buf += tb_ * LANE * 4               # (tb, 128) f32 accumulator scratch
        return buf

    min_tn = 128 if (H % 128 == 0) else H
    while tb_eff > 16 and _footprint(tb_eff, min_tn) > budget:
        tb_eff = max(16, ((tb_eff // 2) // 16) * 16)

    b_pad = -(-b_pad16 // tb_eff) * tb_eff
    nb = b_pad // tb_eff

    # ---- hidden (N) tiling of the (H, H) weight -----------------------------
    if tn is None:
        if _footprint(tb_eff, H) <= budget or H % 128 != 0:
            tn = H                              # keep W1 fully resident (fast path)
        else:
            tn = 128
            for d in range(min(H, 2048), 127, -128):   # largest 128-multiple divisor
                if H % d == 0 and _footprint(tb_eff, d) <= budget:
                    tn = d
                    break
    assert tn == H or (H % tn == 0 and tn % 128 == 0), \
        "tn must be H or a 128-multiple divisor of H"
    n_steps = 1 if tn == H else H // tn

    # ---- operands: f32 x (cast in-kernel), bf16 weights, f32 biases ---------
    x_p = x if b_pad == B else jnp.pad(x, ((0, b_pad - B), (0, 0)))
    w1_bf = w1.astype(jnp.bfloat16)
    w2_p = jnp.zeros((H, LANE), jnp.bfloat16).at[:, :n_cls].set(w2.astype(jnp.bfloat16))
    b1_2d = b1.reshape(1, H).astype(jnp.float32)
    b2_p = jnp.zeros((1, LANE), jnp.float32).at[0, :n_cls].set(b2.astype(jnp.float32))

    # ---- vmem limit & cost estimate ------------------------------------------
    cap = (50 << 20) if small_vmem else (100 << 20)
    vmem_limit = max(32 << 20, min(_footprint(tb_eff, tn) + (8 << 20), cap))

    cost = pl.CostEstimate(
        flops=2 * b_pad * H * H + 2 * b_pad * H * LANE,
        transcendentals=0,
        bytes_accessed=(b_pad * H * 4 + H * H * 2 + H * LANE * 2
                        + b_pad * LANE * 4),
    )

    if n_steps == 1:
        grid = (nb,)
        in_specs = [
            pl.BlockSpec((tb_eff, H), lambda i: (i, 0)),       # x tile (f32)
            pl.BlockSpec((H, H), lambda i: (0, 0)),            # w1 (resident)
            pl.BlockSpec((1, H), lambda i: (0, 0)),            # b1 (resident)
            pl.BlockSpec((H, LANE), lambda i: (0, 0)),         # w2 padded (resident)
            pl.BlockSpec((1, LANE), lambda i: (0, 0)),         # b2 padded (resident)
        ]
        out_specs = pl.BlockSpec((tb_eff, LANE), lambda i: (i, 0))
        scratch_shapes = ()
        kernel = _scls_resident_kernel
        dims = ("parallel",)
    else:
        grid = (nb, n_steps)
        in_specs = [
            pl.BlockSpec((tb_eff, H), lambda i, n: (i, 0)),    # x tile (f32)
            pl.BlockSpec((H, tn), lambda i, n: (0, n)),        # w1 N-slice
            pl.BlockSpec((1, tn), lambda i, n: (0, n)),        # b1 N-slice
            pl.BlockSpec((tn, LANE), lambda i, n: (n, 0)),     # w2 N-slice (padded)
            pl.BlockSpec((1, LANE), lambda i, n: (0, 0)),      # b2 padded (resident)
        ]
        out_specs = pl.BlockSpec((tb_eff, LANE), lambda i, n: (i, 0))
        scratch_shapes = (pltpu.VMEM((tb_eff, LANE), jnp.float32),)
        kernel = _scls_ntiled_kernel
        dims = ("parallel", "arbitrary")

    out = pl.pallas_call(
        kernel,
        out_shape=jax.ShapeDtypeStruct((b_pad, LANE), jnp.float32),
        grid_spec=pltpu.PrefetchScalarGridSpec(
            num_scalar_prefetch=0,
            grid=grid,
            in_specs=in_specs,
            out_specs=out_specs,
            scratch_shapes=scratch_shapes,
        ),
        compiler_params=pltpu.CompilerParams(
            dimension_semantics=dims,
            vmem_limit_bytes=vmem_limit,
        ),
        cost_estimate=cost,
    )(x_p, w1_bf, b1_2d, w2_p, b2_p)

    return out[:B, :n_cls]


def scls_head_ref(x, w1, b1, w2, b2):
    h = jnp.maximum(x @ w1 + b1, 0.0)
    return h @ w2 + b2


if __name__ == "__main__":
    B, H = 16, 32  # small shapes: batch=16, hidden_dim=32, num classes=2

    key = jax.random.PRNGKey(0)
    kx, kw1, kb1, kw2, kb2 = jax.random.split(key, 5)

    x = jax.random.normal(kx, (B, H), dtype=jnp.float32)
    # PyTorch Linear params (weight [out,in], bias [out]) stored pre-transposed
    # to [in, out] for the kernel.
    w1 = jax.random.normal(kw1, (H, H), dtype=jnp.float32) * 0.1   # f1 weight^T
    b1 = jax.random.normal(kb1, (H,), dtype=jnp.float32) * 0.1     # f1 bias
    w2 = jax.random.normal(kw2, (H, 2), dtype=jnp.float32) * 0.1   # f2 weight^T
    b2 = jax.random.normal(kb2, (2,), dtype=jnp.float32) * 0.1     # f2 bias

    out = scls_head(x, w1, b1, w2, b2)
    out = jax.block_until_ready(out)

    ref = scls_head_ref(x, w1, b1, w2, b2)
    assert out.shape == (B, 2)
    # bf16 MXU operands -> compare against the f32 reference at bf16 tolerance.
    assert jnp.allclose(out, ref, atol=3e-2, rtol=3e-2), "mismatch vs reference"

    print("KERNEL_OK")
</pallas_src>

<mosaic_0001>
module attributes {stable_mosaic.version = 11 : i64} {
  func.func @_scls_resident_kernel(%arg0: i32, %arg1: memref<16x32xf32, #tpu.memory_space<vmem>>, %arg2: memref<32x32xbf16, #tpu.memory_space<vmem>>, %arg3: memref<1x32xf32, #tpu.memory_space<vmem>>, %arg4: memref<32x128xbf16, #tpu.memory_space<vmem>>, %arg5: memref<1x128xf32, #tpu.memory_space<vmem>>, %arg6: memref<16x128xf32, #tpu.memory_space<vmem>>) attributes {dimension_semantics = [#tpu.dimension_semantics<parallel>], iteration_bounds = array<i64: 1>, scalar_prefetch = 0 : i64, scratch_operands = 0 : i64, tpu.core_type = #tpu.core_type<tc>, window_params = [{transform_indices = @transform_0, window_bounds = array<i64: 16, 32>}, {pipeline_mode = #tpu.pipeline_mode<synchronous>, transform_indices = @transform_1, window_bounds = array<i64: 32, 32>}, {pipeline_mode = #tpu.pipeline_mode<synchronous>, transform_indices = @transform_2, window_bounds = array<i64: 1, 32>}, {pipeline_mode = #tpu.pipeline_mode<synchronous>, transform_indices = @transform_3, window_bounds = array<i64: 32, 128>}, {pipeline_mode = #tpu.pipeline_mode<synchronous>, transform_indices = @transform_4, window_bounds = array<i64: 1, 128>}, {transform_indices = @transform_5, window_bounds = array<i64: 16, 128>}]} {
    %c0 = arith.constant 0 : index
    %c0_0 = arith.constant 0 : index
    %0 = vector.load %arg1[%c0, %c0_0] : memref<16x32xf32, #tpu.memory_space<vmem>>, vector<16x32xf32>
    %1 = arith.truncf %0 : vector<16x32xf32> to vector<16x32xbf16>
    %c0_1 = arith.constant 0 : index
    %c0_2 = arith.constant 0 : index
    %2 = vector.load %arg2[%c0_1, %c0_2] : memref<32x32xbf16, #tpu.memory_space<vmem>>, vector<32x32xbf16>
    %cst = arith.constant dense<0.000000e+00> : vector<16x32xf32>
    %3 = tpu.matmul %1, %2, %cst {dimension_numbers = #tpu.dot_dimension_numbers<[1], [0], [0], [1], [0, 0, 1, 1], [], []>} : vector<16x32xbf16>, vector<32x32xbf16>, vector<16x32xf32> -> vector<16x32xf32>
    %c0_3 = arith.constant 0 : index
    %c0_4 = arith.constant 0 : index
    %4 = vector.load %arg3[%c0_3, %c0_4] : memref<1x32xf32, #tpu.memory_space<vmem>>, vector<1x32xf32>
    %5 = vector.broadcast %4 : vector<1x32xf32> to vector<16x32xf32>
    %6 = arith.addf %3, %5 : vector<16x32xf32>
    %cst_5 = arith.constant 0.000000e+00 : f32
    %7 = vector.broadcast %cst_5 : f32 to vector<16x32xf32>
    %8 = arith.maximumf %6, %7 : vector<16x32xf32>
    %9 = arith.truncf %8 : vector<16x32xf32> to vector<16x32xbf16>
    %c0_6 = arith.constant 0 : index
    %c0_7 = arith.constant 0 : index
    %10 = vector.load %arg4[%c0_6, %c0_7] : memref<32x128xbf16, #tpu.memory_space<vmem>>, vector<32x128xbf16>
    %cst_8 = arith.constant dense<0.000000e+00> : vector<16x128xf32>
    %11 = tpu.matmul %9, %10, %cst_8 {dimension_numbers = #tpu.dot_dimension_numbers<[1], [0], [0], [1], [0, 0, 1, 1], [], []>} : vector<16x32xbf16>, vector<32x128xbf16>, vector<16x128xf32> -> vector<16x128xf32>
    %c0_9 = arith.constant 0 : index
    %c0_10 = arith.constant 0 : index
    %12 = vector.load %arg5[%c0_9, %c0_10] : memref<1x128xf32, #tpu.memory_space<vmem>>, vector<1x128xf32>
    %13 = vector.broadcast %12 : vector<1x128xf32> to vector<16x128xf32>
    %14 = arith.addf %11, %13 : vector<16x128xf32>
    %c0_11 = arith.constant 0 : index
    %c0_12 = arith.constant 0 : index
    %15 = vector.load %arg6[%c0_11, %c0_12] : memref<16x128xf32, #tpu.memory_space<vmem>>, vector<16x128xf32>
    tpu.vector_store %arg6[%c0_11, %c0_12], %14 {strides = array<i32>} : memref<16x128xf32, #tpu.memory_space<vmem>>, vector<16x128xf32>,
    return
  }
  func.func @transform_0(%arg0: i32) -> (i32, i32) {
    %c0_i32 = arith.constant 0 : i32
    %c0_i32_0 = arith.constant 0 : i32
    return %arg0, %c0_i32 : i32, i32
  }
  func.func @transform_1(%arg0: i32) -> (i32, i32) {
    %c0_i32 = arith.constant 0 : i32
    %c0_i32_0 = arith.constant 0 : i32
    %c0_i32_1 = arith.constant 0 : i32
    return %c0_i32, %c0_i32_0 : i32, i32
  }
  func.func @transform_2(%arg0: i32) -> (i32, i32) {
    %c0_i32 = arith.constant 0 : i32
    %c0_i32_0 = arith.constant 0 : i32
    %c0_i32_1 = arith.constant 0 : i32
    return %c0_i32, %c0_i32_0 : i32, i32
  }
  func.func @transform_3(%arg0: i32) -> (i32, i32) {
    %c0_i32 = arith.constant 0 : i32
    %c0_i32_0 = arith.constant 0 : i32
    %c0_i32_1 = arith.constant 0 : i32
    return %c0_i32, %c0_i32_0 : i32, i32
  }
  func.func @transform_4(%arg0: i32) -> (i32, i32) {
    %c0_i32 = arith.constant 0 : i32
    %c0_i32_0 = arith.constant 0 : i32
    %c0_i32_1 = arith.constant 0 : i32
    return %c0_i32, %c0_i32_0 : i32, i32
  }
  func.func @transform_5(%arg0: i32) -> (i32, i32) {
    %c0_i32 = arith.constant 0 : i32
    %c0_i32_0 = arith.constant 0 : i32
    return %arg0, %c0_i32 : i32, i32
  }
}

</mosaic_0001>

<llo_original>
// kernel: tpu_custom_call.1
$region0: #{tpu_custom_call.1}
  #allocation0 [shape = 'u32[]', space=smem, size = 0x4, offset = 0x4, fixed_abs, tag = 'smem constant byte address 0x4 - core index']
  #allocation1 [shape = 'u32[72,128]{1,0:T(1,128)}', space=vmem, size = 0x9000, scoped, tag = 'internal scratch']
  %s0 = inlined_call_operand.hbm [shape: f32[16,32], index: 0, kind: input, shape index: {}]
  %s1 = inlined_call_operand.hbm [shape: bf16[32,32], index: 1, kind: input, shape index: {}]
  %s2 = inlined_call_operand.vmem [shape: f32[1,32], index: 2, kind: input, shape index: {}]
  %s3 = inlined_call_operand.hbm [shape: bf16[32,128], index: 3, kind: input, shape index: {}]
  %s4 = inlined_call_operand.vmem [shape: f32[1,128], index: 4, kind: input, shape index: {}]
  %s5 = inlined_call_operand.hbm [shape: f32[16,128], index: 5, kind: output, shape index: {}]
  %s6 = sld [smem:[#allocation0]]
  $region42: #{tpu_custom_call.1} parent=0
    _
  %s8 = ssub.s32 1, %s6
  %s9 = scalar_select 0, %s8, %s6
  $region1: #{tpu_custom_call.1} parent=0
    #allocation2 [shape = 'u8[8192]{0}', space=vmem, size = 0x2000, scoped, tag = 'input window, operand 0, single buffered']
    #allocation3 [shape = 's32[1]{0}', space=sflag, size = 0x4, scoped, tag = 'scoped memory for tpu_custom_call.1']
    #allocation4 [shape = 's32[1]{0}', space=sflag, size = 0x4, scoped, tag = 'scoped memory for tpu_custom_call.1']
    #allocation5 [shape = 'u8[8192]{0}', space=vmem, size = 0x2000, scoped, tag = 'input window, operand 1, single buffered']
    #allocation6 [shape = 's32[1]{0}', space=sflag, size = 0x4, scoped, tag = 'scoped memory for tpu_custom_call.1']
    #allocation7 [shape = 'u8[8192]{0}', space=vmem, size = 0x2000, scoped, tag = 'input window, operand 3, single buffered']
    #allocation8 [shape = 'u8[8192]{0}', space=vmem, size = 0x2000, scoped, tag = 'output window, operand 0, single buffered']
    %10 = vsyncpa [#allocation3], 0
    %11 = vsyncpa [#allocation6], 0
    %12 = vsyncpa [#allocation4], 0
    // Predicated region
    $region2: #{tpu_custom_call.1} parent=1 // pred_check
      _
    $region3: #{tpu_custom_call.1} parent=1 // pred_check_branch
      %14 = sbr.rel (0) target = $region5
    $region4: #{tpu_custom_call.1} parent=1 // pred_region
      %16 = vsyncadd [#allocation3], 0
      %s17 = sshll.u32 %s0, 4
      %s18 = int_to_ptr.hbm [resolvable:$true] %s17
      %s19 = sshll.u32 [#allocation2], 4
      %s20 = int_to_ptr.vmem [resolvable:$true] %s19
      %25 = dma.hbm_to_vmem [thread:$0]  %s18, 256, %s20, [#allocation3], 128, 128, 8
    $region5: #{tpu_custom_call.1} parent=1 // pred_fallthru
      _
    // Predicated region
    $region6: #{tpu_custom_call.1} parent=1 // pred_check
      _
    $region7: #{tpu_custom_call.1} parent=1 // pred_check_branch
      %27 = sbr.rel (0) target = $region9
    $region8: #{tpu_custom_call.1} parent=1 // pred_region
      %29 = vsyncadd [#allocation6], 0
      %s30 = sshll.u32 %s1, 4
      %s31 = int_to_ptr.hbm [resolvable:$true] %s30
      %s32 = sshll.u32 [#allocation5], 4
      %s33 = int_to_ptr.vmem [resolvable:$true] %s32
      %38 = dma.hbm_to_vmem [thread:$0]  %s31, 256, %s33, [#allocation6], 64, 64, 4
    $region9: #{tpu_custom_call.1} parent=1 // pred_fallthru
      _
    // Predicated region
    $region10: #{tpu_custom_call.1} parent=1 // pred_check
      _
    $region11: #{tpu_custom_call.1} parent=1 // pred_check_branch
      %40 = sbr.rel (0) target = $region13
    $region12: #{tpu_custom_call.1} parent=1 // pred_region
      _
    $region13: #{tpu_custom_call.1} parent=1 // pred_fallthru
      _
    // Predicated region
    $region14: #{tpu_custom_call.1} parent=1 // pred_check
      _
    $region15: #{tpu_custom_call.1} parent=1 // pred_check_branch
      %42 = sbr.rel (0) target = $region17
    $region16: #{tpu_custom_call.1} parent=1 // pred_region
      %44 = vsyncadd [#allocation6], 0
      %s45 = sshll.u32 %s3, 4
      %s46 = int_to_ptr.hbm [resolvable:$true] %s45
      %s47 = sshll.u32 [#allocation7], 4
      %s48 = int_to_ptr.vmem [resolvable:$true] %s47
      %53 = dma.hbm_to_vmem [thread:$0]  %s46, 256, %s48, [#allocation6], 64, 64, 4
    $region17: #{tpu_custom_call.1} parent=1 // pred_fallthru
      _
    // Predicated region
    $region18: #{tpu_custom_call.1} parent=1 // pred_check
      _
    $region19: #{tpu_custom_call.1} parent=1 // pred_check_branch
      %55 = sbr.rel (0) target = $region21
    $region20: #{tpu_custom_call.1} parent=1 // pred_region
      _
    $region21: #{tpu_custom_call.1} parent=1 // pred_fallthru
      _
    // Predicated region
    $region22: #{tpu_custom_call.1} parent=1 // pred_check
      _
    $region23: #{tpu_custom_call.1} parent=1 // pred_check_branch
      %57 = sbr.rel (0) target = $region25
    $region24: #{tpu_custom_call.1} parent=1 // pred_region
      %59 = dma.done [#allocation3], 256
    $region25: #{tpu_custom_call.1} parent=1 // pred_fallthru
      _
    // Predicated region
    $region26: #{tpu_custom_call.1} parent=1 // pred_check
      _
    $region27: #{tpu_custom_call.1} parent=1 // pred_check_branch
      %61 = sbr.rel (0) target = $region29
    $region28: #{tpu_custom_call.1} parent=1 // pred_region
      %63 = dma.done [#allocation6], 256
    $region29: #{tpu_custom_call.1} parent=1 // pred_fallthru
      _
    // Predicated region
    $region30: #{tpu_custom_call.1} parent=1 // pred_check
      _
    $region31: #{tpu_custom_call.1} parent=1 // pred_check_branch
      %65 = sbr.rel (0) target = $region33
    $region32: #{tpu_custom_call.1} parent=1 // pred_region
      %67 = dma.done [#allocation6], 256
    $region33: #{tpu_custom_call.1} parent=1 // pred_fallthru
      _
    %v69 = vld [vmem:[#allocation2] sm:$0xff]
    %v70 = vld [vmem:[#allocation2 + $0x8] sm:$0xff]
    %v71 = vpack.c.bf16 %v70, %v69
    %v72 = vld [vmem:[#allocation5] sm:$0xf]
    %v73 = vld [vmem:[#allocation5 + $0x4] sm:$0xf]
    %v74 = vld [vmem:[#allocation5 + $0x8] sm:$0xf]
    %v75 = vld [vmem:[#allocation5 + $0xc] sm:$0xf]
    %v76 = vld [vmem:[%s2] sm:$0x1]
    %v78 = vperm.slane %v76, 0
    %v84 = vunpack.c.l.b16 %v72
    %v85 = vunpack.c.l.b16 %v73
    %v86 = vunpack.c.l.b16 %v74
    %v87 = vunpack.c.l.b16 %v75
    %v88 = vpack.c.b16 %v85, %v84
    %v89 = vpack.c.b16 %v87, %v86
    %vm92 = vcmask 261120
    %v94 = vsel %vm92, %v71, 0
    %96 = vmatpush.bf16.msra.mxu0 0
    %97 = vmatpush.bf16.msra.mxu0 0
    %98 = vmatpush.bf16.msra.mxu0 0
    %99 = vmatpush.bf16.msra.mxu0 0
    %100 = vmatpush.bf16.msra.mxu0 0
    %101 = vmatpush.bf16.msra.mxu0 0
    %102 = vmatpush.bf16.msra.mxu0 %v89
    %103 = vmatpush.bf16.msra.mxu0 %v88
    %104 = vmatmul.bf16.gmra.mxu0 %v94
    %v105 = vpop.f32.mrf.mxu0
    %v106 = vadd.f32 %v78, %v105
    %v107 = vpop.f32.mrf.mxu0
    %v108 = vadd.f32 %v78, %v107
    %109 = vdwg.mxu0
    %v110 = vmax.f32 %v106, 0.0
    %v111 = vmax.f32 %v108, 0.0
    %v112 = vpack.c.bf16 %v111, %v110
    %v113 = vld [vmem:[#allocation7] sm:$0xf]
    %v114 = vld [vmem:[#allocation7 + $0x4] sm:$0xf]
    %v115 = vld [vmem:[#allocation7 + $0x8] sm:$0xf]
    %v116 = vld [vmem:[#allocation7 + $0xc] sm:$0xf]
    %v117 = vld [vmem:[%s4] sm:$0x1]
    %v119 = vperm.slane %v117, 0
    %v125 = vunpack.c.l.b16 %v113
    %v126 = vunpack.c.l.b16 %v114
    %v127 = vunpack.c.l.b16 %v115
    %v128 = vunpack.c.l.b16 %v116
    %v129 = vpack.c.b16 %v126, %v125
    %v130 = vpack.c.b16 %v128, %v127
    %v134 = vsel %vm92, %v112, 0
    %136 = vmatpush.bf16.msra.mxu0 0
    %137 = vmatpush.bf16.msra.mxu0 0
    %138 = vmatpush.bf16.msra.mxu0 0
    %139 = vmatpush.bf16.msra.mxu0 0
    %140 = vmatpush.bf16.msra.mxu0 0
    %141 = vmatpush.bf16.msra.mxu0 0
    %142 = vmatpush.bf16.msra.mxu0 %v130
    %143 = vmatpush.bf16.msra.mxu0 %v129
    %144 = vmatmul.bf16.gmra.mxu0 %v134
    %v145 = vpop.f32.mrf.mxu0
    %v146 = vadd.f32 %v119, %v145
    %v147 = vpop.f32.mrf.mxu0
    %v148 = vadd.f32 %v119, %v147
    %149 = vdwg.mxu0
    %150 = vst [vmem:[#allocation8] sm:$0xff] %v146
    %151 = vst [vmem:[#allocation8 + $0x8] sm:$0xff] %v148
    // Predicated region
    $region34: #{tpu_custom_call.1} parent=1 // pred_check
      _
    $region35: #{tpu_custom_call.1} parent=1 // pred_check_branch
      %153 = sbr.rel (0) target = $region37
    $region36: #{tpu_custom_call.1} parent=1 // pred_region
      %155 = vsyncadd [#allocation4], 0
      %s156 = sshll.u32 [#allocation8], 4
      %s157 = int_to_ptr.vmem [resolvable:$true] %s156
      %s158 = sshll.u32 %s5, 4
      %s159 = int_to_ptr.hbm [resolvable:$true] %s158
      %164 = dma.vmem_to_hbm [thread:$0]  %s157, 256, %s159, [#allocation4], 128, 128, 8
    $region37: #{tpu_custom_call.1} parent=1 // pred_fallthru
      _
    // Predicated region
    $region38: #{tpu_custom_call.1} parent=1 // pred_check
      _
    $region39: #{tpu_custom_call.1} parent=1 // pred_check_branch
      %166 = sbr.rel (0) target = $region41
    $region40: #{tpu_custom_call.1} parent=1 // pred_region
      %168 = dma.done [#allocation4], 256
    $region41: #{tpu_custom_call.1} parent=1 // pred_fallthru
      _
    %169 = vsyncpa [#allocation3], 1
    %170 = vsyncpa [#allocation6], 1
    %171 = vsyncpa [#allocation4], 1

</llo_original>
